<compile_context>
chip_gen: v6e
topology: v6e:2x2x1
jax: 0.10.0
libtpu: 0.0.40
codegen_flags: <defaults>
</compile_context>

<pallas_src>
import functools

import jax
import jax.numpy as jnp
from jax.experimental import pallas as pl
from jax.experimental.pallas import tpu as pltpu


def _round_up(n, m):
    return ((n + m - 1) // m) * m


def _make_mlp_kernel(n_linear, in_dim):
    """Fused MLP kernel.

    x_ref   : (B, in_dim) f32        narrow input (no 128-lane pre-padding)
    w_ref   : (n_linear, F, F) bf16  zero-padded weight slab, stored (in, out)
    b_ref   : (n_linear, 1, F) f32   zero-padded bias slab
    out_ref : (B, F) f32             lane-dense output slab
    """

    def kernel(x_ref, w_ref, b_ref, out_ref):
        h = x_ref[...]                       # (B, in_dim) f32
        for i in range(n_linear):            # static unroll
            if i >= 2:                       # Tanh precedes every linear from index 2 on
                h = jnp.tanh(h)
            if i == 0:
                w = w_ref[0, :in_dim, :]     # (in_dim, F): first layer K = in_dim
            else:
                w = w_ref[i]                 # (F, F) bf16, static slice
            b = b_ref[i]                     # (1, F) f32, broadcast over batch
            h = jnp.dot(h.astype(jnp.bfloat16), w,
                        preferred_element_type=jnp.float32) + b
        out_ref[...] = h                     # full-width unmasked store

    return kernel


def init_model_deploy_params(key, layer_sizes):
    """Deterministic init mimicking PyTorch nn.Linear defaults (U(-k,k), k=1/sqrt(fan_in)).

    Returns a list of (W, b) with W in PyTorch layout (out_features, in_features).
    """
    dims = [(layer_sizes[0], layer_sizes[0]), (layer_sizes[0], layer_sizes[1])]
    for d_in, d_out in zip(layer_sizes[1:-1], layer_sizes[2:]):
        dims.append((d_in, d_out))

    params = []
    for (d_in, d_out) in dims:
        key, kw, kb = jax.random.split(key, 3)
        bound = 1.0 / jnp.sqrt(jnp.float32(d_in))
        w = jax.random.uniform(kw, (d_out, d_in), jnp.float32, -bound, bound)
        b = jax.random.uniform(kb, (d_out,), jnp.float32, -bound, bound)
        params.append((w, b))
    return params


def pack_params(params):
    """Pack per-layer (W, b) into one padded bf16 weight slab and one f32 bias slab.

    W is PyTorch layout (out, in); stored transposed to (in, out) at [:in, :out].
    Padded rows/cols/lanes are exactly zero.
    """
    n_linear = len(params)
    max_dim = max(max(w.shape) for (w, _) in params)
    F = _round_up(max_dim, 128)

    w_slab = jnp.zeros((n_linear, F, F), jnp.float32)
    b_slab = jnp.zeros((n_linear, 1, F), jnp.float32)
    for i, (w, b) in enumerate(params):
        d_out, d_in = w.shape
        w_slab = w_slab.at[i, :d_in, :d_out].set(w.T)
        b_slab = b_slab.at[i, 0, :d_out].set(b)
    return w_slab.astype(jnp.bfloat16), b_slab


@functools.partial(jax.jit, static_argnames=("out_dim", "max_batch_tile"))
def model_deploy_forward(x, w_slab, b_slab, *, out_dim, max_batch_tile=2048):
    """Run the fused MLP Pallas kernel and return (batch, out_dim) f32."""
    n_linear, F, _ = w_slab.shape
    batch, in_dim = x.shape
    kernel = _make_mlp_kernel(n_linear, in_dim)
    vmem = pl.BlockSpec(memory_space=pltpu.MemorySpace.VMEM)

    if batch <= 128:
        # Small (deployment) batch: single whole-VMEM invocation, no grid.
        # bf16 MXU operands pack (16,128) vregs -> pad batch to 16 rows.
        b_pad = max(_round_up(batch, 16), 16)
        x_pad = jnp.zeros((b_pad, in_dim), jnp.float32).at[:batch, :].set(x)
        out_pad = pl.pallas_call(
            kernel,
            out_shape=jax.ShapeDtypeStruct((b_pad, F), jnp.float32),
            in_specs=[vmem, vmem, vmem],
            out_specs=vmem,
        )(x_pad, w_slab, b_slab)
    else:
        # Large batch: tile the batch axis.  Tile is as big as possible
        # (amortizes per-step overhead, raises MXU M-dim occupancy on v6e/v7x)
        # while keeping >= ~4 grid steps so v7x's two TensorCores share work.
        # Cap at 2048 rows: in/out double buffers stay well under the 16 MiB
        # scoped-VMEM default even on v5e.
        tile = min(max_batch_tile,
                   max(128, _round_up(pl.cdiv(batch, 4), 128)))
        b_pad = _round_up(batch, tile)
        x_pad = jnp.zeros((b_pad, in_dim), jnp.float32).at[:batch, :].set(x)
        grid = (b_pad // tile,)
        out_pad = pl.pallas_call(
            kernel,
            out_shape=jax.ShapeDtypeStruct((b_pad, F), jnp.float32),
            grid=grid,
            in_specs=[
                # Narrow (tile, in_dim) input block: legal because in_dim is
                # the full last dim of x; ~4x less input DMA than padding to F.
                pl.BlockSpec((tile, in_dim), lambda i: (i, 0)),
                # Grid-invariant weight / bias slabs: whole-array VMEM
                # residency (one copy, no per-step double buffering).
                vmem,
                vmem,
            ],
            out_specs=pl.BlockSpec((tile, F), lambda i: (i, 0)),
            compiler_params=pltpu.CompilerParams(
                dimension_semantics=("parallel",)),
        )(x_pad, w_slab, b_slab)

    return out_pad[:batch, :out_dim]


def model_deploy_reference_f32(x, params):
    """Pure-JAX f32 reference matching the PyTorch forward."""
    h = x
    for i, (w, b) in enumerate(params):
        if i >= 2:
            h = jnp.tanh(h)
        h = jnp.dot(h, w.T, precision=jax.lax.Precision.HIGHEST) + b
    return h


def model_deploy_reference_bf16(x, params):
    """Reference that mimics the kernel numerics (bf16 matmul inputs, f32 accumulate)."""
    h = x.astype(jnp.float32)
    for i, (w, b) in enumerate(params):
        if i >= 2:
            h = jnp.tanh(h)
        h = jnp.dot(h.astype(jnp.bfloat16), w.T.astype(jnp.bfloat16),
                    preferred_element_type=jnp.float32) + b
    return h


if __name__ == "__main__":
    layer_sizes = [32, 64, 64, 8]

    key = jax.random.PRNGKey(0)
    key, kx, kx2, kx3 = jax.random.split(key, 4)
    params = init_model_deploy_params(key, layer_sizes)
    w_slab, b_slab = pack_params(params)

    # --- Small batch (no-grid path), matching the deployment use case. ---
    batch = 2
    x = jax.random.normal(kx, (batch, layer_sizes[0]), jnp.float32)

    out = model_deploy_forward(x, w_slab, b_slab, out_dim=layer_sizes[-1])
    out = jax.block_until_ready(out)
    assert out.shape == (batch, layer_sizes[-1])

    ref_bf16 = model_deploy_reference_bf16(x, params)
    ref_f32 = model_deploy_reference_f32(x, params)
    assert jnp.allclose(out, ref_bf16, atol=1e-3, rtol=1e-3), (
        f"bf16-ref max abs err {jnp.max(jnp.abs(out - ref_bf16))}")
    assert jnp.allclose(out, ref_f32, atol=3e-2, rtol=3e-2), (
        f"f32-ref max abs err {jnp.max(jnp.abs(out - ref_f32))}")

    # --- Larger batch (gridded, parallel batch axis, small tile). ---
    batch2 = 300
    x2 = jax.random.normal(kx2, (batch2, layer_sizes[0]), jnp.float32)
    out2 = model_deploy_forward(x2, w_slab, b_slab, out_dim=layer_sizes[-1])
    out2 = jax.block_until_ready(out2)
    assert out2.shape == (batch2, layer_sizes[-1])

    ref2_bf16 = model_deploy_reference_bf16(x2, params)
    ref2_f32 = model_deploy_reference_f32(x2, params)
    assert jnp.allclose(out2, ref2_bf16, atol=1e-3, rtol=1e-3), (
        f"bf16-ref max abs err {jnp.max(jnp.abs(out2 - ref2_bf16))}")
    assert jnp.allclose(out2, ref2_f32, atol=3e-2, rtol=3e-2), (
        f"f32-ref max abs err {jnp.max(jnp.abs(out2 - ref2_f32))}")

    # --- Big batch to exercise the large (1024-row) tile path. ---
    batch3 = 4096
    x3 = jax.random.normal(kx3, (batch3, layer_sizes[0]), jnp.float32)
    out3 = model_deploy_forward(x3, w_slab, b_slab, out_dim=layer_sizes[-1])
    out3 = jax.block_until_ready(out3)
    assert out3.shape == (batch3, layer_sizes[-1])

    ref3_bf16 = model_deploy_reference_bf16(x3, params)
    assert jnp.allclose(out3, ref3_bf16, atol=1e-3, rtol=1e-3), (
        f"bf16-ref max abs err {jnp.max(jnp.abs(out3 - ref3_bf16))}")

    print("KERNEL_OK")
</pallas_src>

<mosaic_0001>
module attributes {stable_mosaic.version = 11 : i64} {
  func.func @kernel(%arg0: memref<16x32xf32, #tpu.memory_space<vmem>>, %arg1: memref<4x128x128xbf16, #tpu.memory_space<vmem>>, %arg2: memref<4x1x128xf32, #tpu.memory_space<vmem>>, %arg3: memref<16x128xf32, #tpu.memory_space<vmem>>) attributes {dimension_semantics = [], scalar_prefetch = 0 : i64, scratch_operands = 0 : i64, tpu.core_type = #tpu.core_type<tc>} {
    %c0 = arith.constant 0 : index
    %c0_0 = arith.constant 0 : index
    %0 = vector.load %arg0[%c0, %c0_0] : memref<16x32xf32, #tpu.memory_space<vmem>>, vector<16x32xf32>
    %c0_1 = arith.constant 0 : index
    %c0_2 = arith.constant 0 : index
    %c0_3 = arith.constant 0 : index
    %1 = vector.load %arg1[%c0_1, %c0_2, %c0_3] : memref<4x128x128xbf16, #tpu.memory_space<vmem>>, vector<1x32x128xbf16>
    %2 = vector.shape_cast %1 : vector<1x32x128xbf16> to vector<32x128xbf16>
    %c0_4 = arith.constant 0 : index
    %c0_5 = arith.constant 0 : index
    %c0_6 = arith.constant 0 : index
    %3 = vector.load %arg2[%c0_4, %c0_5, %c0_6] : memref<4x1x128xf32, #tpu.memory_space<vmem>>, vector<1x1x128xf32>
    %4 = vector.shape_cast %3 : vector<1x1x128xf32> to vector<1x128xf32>
    %5 = arith.truncf %0 : vector<16x32xf32> to vector<16x32xbf16>
    %cst = arith.constant dense<0.000000e+00> : vector<16x128xf32>
    %6 = tpu.matmul %5, %2, %cst {dimension_numbers = #tpu.dot_dimension_numbers<[1], [0], [0], [1], [0, 0, 1, 1], [], []>} : vector<16x32xbf16>, vector<32x128xbf16>, vector<16x128xf32> -> vector<16x128xf32>
    %7 = vector.broadcast %4 : vector<1x128xf32> to vector<16x128xf32>
    %8 = arith.addf %6, %7 : vector<16x128xf32>
    %c1 = arith.constant 1 : index
    %c0_7 = arith.constant 0 : index
    %c0_8 = arith.constant 0 : index
    %9 = vector.load %arg1[%c1, %c0_7, %c0_8] : memref<4x128x128xbf16, #tpu.memory_space<vmem>>, vector<1x128x128xbf16>
    %10 = vector.shape_cast %9 : vector<1x128x128xbf16> to vector<128x128xbf16>
    %c1_9 = arith.constant 1 : index
    %c0_10 = arith.constant 0 : index
    %c0_11 = arith.constant 0 : index
    %11 = vector.load %arg2[%c1_9, %c0_10, %c0_11] : memref<4x1x128xf32, #tpu.memory_space<vmem>>, vector<1x1x128xf32>
    %12 = vector.shape_cast %11 : vector<1x1x128xf32> to vector<1x128xf32>
    %13 = arith.truncf %8 : vector<16x128xf32> to vector<16x128xbf16>
    %cst_12 = arith.constant dense<0.000000e+00> : vector<16x128xf32>
    %14 = tpu.matmul %13, %10, %cst_12 {dimension_numbers = #tpu.dot_dimension_numbers<[1], [0], [0], [1], [0, 0, 1, 1], [], []>} : vector<16x128xbf16>, vector<128x128xbf16>, vector<16x128xf32> -> vector<16x128xf32>
    %15 = vector.broadcast %12 : vector<1x128xf32> to vector<16x128xf32>
    %16 = arith.addf %14, %15 : vector<16x128xf32>
    %17 = math.tanh %16 : vector<16x128xf32>
    %c2 = arith.constant 2 : index
    %c0_13 = arith.constant 0 : index
    %c0_14 = arith.constant 0 : index
    %18 = vector.load %arg1[%c2, %c0_13, %c0_14] : memref<4x128x128xbf16, #tpu.memory_space<vmem>>, vector<1x128x128xbf16>
    %19 = vector.shape_cast %18 : vector<1x128x128xbf16> to vector<128x128xbf16>
    %c2_15 = arith.constant 2 : index
    %c0_16 = arith.constant 0 : index
    %c0_17 = arith.constant 0 : index
    %20 = vector.load %arg2[%c2_15, %c0_16, %c0_17] : memref<4x1x128xf32, #tpu.memory_space<vmem>>, vector<1x1x128xf32>
    %21 = vector.shape_cast %20 : vector<1x1x128xf32> to vector<1x128xf32>
    %22 = arith.truncf %17 : vector<16x128xf32> to vector<16x128xbf16>
    %cst_18 = arith.constant dense<0.000000e+00> : vector<16x128xf32>
    %23 = tpu.matmul %22, %19, %cst_18 {dimension_numbers = #tpu.dot_dimension_numbers<[1], [0], [0], [1], [0, 0, 1, 1], [], []>} : vector<16x128xbf16>, vector<128x128xbf16>, vector<16x128xf32> -> vector<16x128xf32>
    %24 = vector.broadcast %21 : vector<1x128xf32> to vector<16x128xf32>
    %25 = arith.addf %23, %24 : vector<16x128xf32>
    %26 = math.tanh %25 : vector<16x128xf32>
    %c3 = arith.constant 3 : index
    %c0_19 = arith.constant 0 : index
    %c0_20 = arith.constant 0 : index
    %27 = vector.load %arg1[%c3, %c0_19, %c0_20] : memref<4x128x128xbf16, #tpu.memory_space<vmem>>, vector<1x128x128xbf16>
    %28 = vector.shape_cast %27 : vector<1x128x128xbf16> to vector<128x128xbf16>
    %c3_21 = arith.constant 3 : index
    %c0_22 = arith.constant 0 : index
    %c0_23 = arith.constant 0 : index
    %29 = vector.load %arg2[%c3_21, %c0_22, %c0_23] : memref<4x1x128xf32, #tpu.memory_space<vmem>>, vector<1x1x128xf32>
    %30 = vector.shape_cast %29 : vector<1x1x128xf32> to vector<1x128xf32>
    %31 = arith.truncf %26 : vector<16x128xf32> to vector<16x128xbf16>
    %cst_24 = arith.constant dense<0.000000e+00> : vector<16x128xf32>
    %32 = tpu.matmul %31, %28, %cst_24 {dimension_numbers = #tpu.dot_dimension_numbers<[1], [0], [0], [1], [0, 0, 1, 1], [], []>} : vector<16x128xbf16>, vector<128x128xbf16>, vector<16x128xf32> -> vector<16x128xf32>
    %33 = vector.broadcast %30 : vector<1x128xf32> to vector<16x128xf32>
    %34 = arith.addf %32, %33 : vector<16x128xf32>
    %c0_25 = arith.constant 0 : index
    %c0_26 = arith.constant 0 : index
    %35 = vector.load %arg3[%c0_25, %c0_26] : memref<16x128xf32, #tpu.memory_space<vmem>>, vector<16x128xf32>
    tpu.vector_store %arg3[%c0_25, %c0_26], %34 {strides = array<i32>} : memref<16x128xf32, #tpu.memory_space<vmem>>, vector<16x128xf32>,
    return
  }
}

</mosaic_0001>

<llo_original>
// kernel: model_deploy_forward.1
$region0: #{model_deploy_forward.1}
  #allocation0 [shape = 'u32[]', space=smem, size = 0x4, offset = 0x4, fixed_abs, tag = 'smem constant byte address 0x4 - core index']
  #allocation1 [shape = 'u32[144,128]{1,0:T(1,128)}', space=vmem, size = 0x12000, scoped, tag = 'internal scratch']
  %s0 = inlined_call_operand.vmem [shape: f32[16,32], index: 0, kind: input, shape index: {}]
  %s1 = inlined_call_operand.hbm [shape: bf16[4,128,128], index: 1, kind: input, shape index: {}]
  %s2 = inlined_call_operand.vmem [shape: f32[4,1,128], index: 2, kind: input, shape index: {}]
  %s3 = inlined_call_operand.vmem [shape: f32[16,128], index: 3, kind: output, shape index: {}]
  %s4 = sld [smem:[#allocation0]]
  $region26: #{model_deploy_forward.1} parent=0
    _
  %s6 = ssub.s32 1, %s4
  %s7 = scalar_select 0, %s6, %s4
  $region1: #{model_deploy_forward.1} parent=0
    #allocation2 [shape = 'u8[131072]{0}', space=vmem, size = 0x20000, scoped, tag = 'input window, operand 1, single buffered']
    #allocation3 [shape = 's32[1]{0}', space=sflag, size = 0x4, scoped, tag = 'scoped memory for model_deploy_forward.1']
    %8 = vsyncpa [#allocation3], 0
    // Predicated region
    $region2: #{model_deploy_forward.1} parent=1 // pred_check
      _
    $region3: #{model_deploy_forward.1} parent=1 // pred_check_branch
      %10 = sbr.rel (0) target = $region5
    $region4: #{model_deploy_forward.1} parent=1 // pred_region
      _
    $region5: #{model_deploy_forward.1} parent=1 // pred_fallthru
      _
    // Predicated region
    $region6: #{model_deploy_forward.1} parent=1 // pred_check
      _
    $region7: #{model_deploy_forward.1} parent=1 // pred_check_branch
      %12 = sbr.rel (0) target = $region9
    $region8: #{model_deploy_forward.1} parent=1 // pred_region
      %s14 = ssub.s32 4096, 4096
      %15 = vsyncadd [#allocation3], %s14
      %s16 = sshll.u32 [#allocation2], 4
      %s17 = int_to_ptr.vmem [resolvable:$true] %s16
      %22 = dma.hbm_to_vmem [thread:$0]  %s1, 4096, %s17, [#allocation3], 64, 64, 4
    $region9: #{model_deploy_forward.1} parent=1 // pred_fallthru
      _
    // Predicated region
    $region10: #{model_deploy_forward.1} parent=1 // pred_check
      _
    $region11: #{model_deploy_forward.1} parent=1 // pred_check_branch
      %24 = sbr.rel (0) target = $region13
    $region12: #{model_deploy_forward.1} parent=1 // pred_region
      _
    $region13: #{model_deploy_forward.1} parent=1 // pred_fallthru
      _
    // Predicated region
    $region14: #{model_deploy_forward.1} parent=1 // pred_check
      _
    $region15: #{model_deploy_forward.1} parent=1 // pred_check_branch
      %26 = sbr.rel (0) target = $region17
    $region16: #{model_deploy_forward.1} parent=1 // pred_region
      %27 = dma.done [#allocation3], 4096
    $region17: #{model_deploy_forward.1} parent=1 // pred_fallthru
      _
    %v29 = vld [vmem:[%s0] sm:$0xff]
    %v30 = vld [vmem:[%s0 + $0x8] sm:$0xff]
    %v31 = vld [vmem:[#allocation2] sm:$0xf]
    %v32 = vld [vmem:[#allocation2 + $0x4] sm:$0xf]
    %v33 = vld [vmem:[#allocation2 + $0x8] sm:$0xf]
    %v34 = vld [vmem:[#allocation2 + $0xc] sm:$0xf]
    %v35 = vld [vmem:[%s2] sm:$0x1]
    %v36 = vpack.c.bf16 %v30, %v29
    %v38 = vlaneseq
    %v39 = vshrl.u32 %v38, 7
    %v40 = vsub.s32 0, %v39
    %v41 = vrot.slane %v35, %v40
    %v47 = vunpack.c.l.b16 %v31
    %v48 = vunpack.c.l.b16 %v32
    %v49 = vunpack.c.l.b16 %v33
    %v50 = vunpack.c.l.b16 %v34
    %v51 = vpack.c.b16 %v48, %v47
    %v52 = vpack.c.b16 %v50, %v49
    %vm55 = vcmask 261120
    %v57 = vsel %vm55, %v36, 0
    %59 = vmatprep.subr.bf16.mxu0 0
    %60 = vmatpush1.bf16.msra.mxu0 0
    %61 = vmatprep.subr.bf16.mxu0 0
    %62 = vmatpush1.bf16.msra.mxu0 0
    %63 = vmatprep.subr.bf16.mxu0 0
    %64 = vmatpush1.bf16.msra.mxu0 0
    %65 = vmatprep.subr.bf16.mxu0 0
    %66 = vmatpush1.bf16.msra.mxu0 0
    %67 = vmatprep.subr.bf16.mxu0 0
    %68 = vmatpush1.bf16.msra.mxu0 0
    %69 = vmatprep.subr.bf16.mxu0 0
    %70 = vmatpush1.bf16.msra.mxu0 0
    %71 = vmatprep.subr.bf16.mxu0 0
    %72 = vmatpush1.bf16.msra.mxu0 %v52
    %73 = vmatprep.subr.bf16.mxu0 0
    %74 = vmatpush1.bf16.msra.mxu0 %v51
    %75 = vmatprep.subr.bf16.mxu0 0
    %76 = vmatpush2.bf16.msra.mxu0 0
    %77 = vmatprep.subr.bf16.mxu0 0
    %78 = vmatpush2.bf16.msra.mxu0 0
    %79 = vmatprep.subr.bf16.mxu0 0
    %80 = vmatpush2.bf16.msra.mxu0 0
    %81 = vmatprep.subr.bf16.mxu0 0
    %82 = vmatpush2.bf16.msra.mxu0 0
    %83 = vmatprep.subr.bf16.mxu0 0
    %84 = vmatpush2.bf16.msra.mxu0 0
    %85 = vmatprep.subr.bf16.mxu0 0
    %86 = vmatpush2.bf16.msra.mxu0 0
    %87 = vmatprep.subr.bf16.mxu0 0
    %88 = vmatpush2.bf16.msra.mxu0 0
    %89 = vmatprep.subr.bf16.mxu0 0
    %90 = vmatpush2.bf16.msra.mxu0 0
    %91 = vmatprep.mubr.bf16.mxu0 0
    %92 = vmatmul.mubr.bf16.gmra.mxu0 %v57
    %v93 = vpop.f32.mrf.mxu0
    %v94 = vadd.f32 %v41, %v93
    %v95 = vpop.f32.mrf.mxu0
    %v96 = vpop.f32.mrf.mxu0
    %v97 = vadd.f32 %v41, %v96
    %v98 = vpop.f32.mrf.mxu0
    %99 = vdwg.mxu0
    %s100 = scalar_lea.vmem [#allocation2], 64
    %v101 = vld [vmem:[%s100] sm:$0xf]
    %v102 = vld [vmem:[%s100 + $0x4] sm:$0xf]
    %v103 = vld [vmem:[%s100 + $0x8] sm:$0xf]
    %v104 = vld [vmem:[%s100 + $0xc] sm:$0xf]
    %v105 = vld [vmem:[%s100 + $0x10] sm:$0xf]
    %v106 = vld [vmem:[%s100 + $0x14] sm:$0xf]
    %v107 = vld [vmem:[%s100 + $0x18] sm:$0xf]
    %v108 = vld [vmem:[%s100 + $0x1c] sm:$0xf]
    %v109 = vld [vmem:[%s100 + $0x20] sm:$0xf]
    %v110 = vld [vmem:[%s100 + $0x24] sm:$0xf]
    %v111 = vld [vmem:[%s100 + $0x28] sm:$0xf]
    %v112 = vld [vmem:[%s100 + $0x2c] sm:$0xf]
    %v113 = vld [vmem:[%s100 + $0x30] sm:$0xf]
    %v114 = vld [vmem:[%s100 + $0x34] sm:$0xf]
    %v115 = vld [vmem:[%s100 + $0x38] sm:$0xf]
    %v116 = vld [vmem:[%s100 + $0x3c] sm:$0xf]
    %s117 = scalar_lea.vmem %s2, 1
    %v118 = vld [vmem:[%s117] sm:$0x1]
    %v119 = vpack.c.bf16 %v97, %v94
    %v121 = vlaneseq
    %v122 = vshrl.u32 %v121, 7
    %v123 = vsub.s32 0, %v122
    %v124 = vrot.slane %v118, %v123
    %v142 = vunpack.c.l.b16 %v101
    %v143 = vunpack.c.l.b16 %v102
    %v144 = vunpack.c.l.b16 %v103
    %v145 = vunpack.c.l.b16 %v104
    %v146 = vunpack.c.l.b16 %v105
    %v147 = vunpack.c.l.b16 %v106
    %v148 = vunpack.c.l.b16 %v107
    %v149 = vunpack.c.l.b16 %v108
    %v150 = vunpack.c.l.b16 %v109
    %v151 = vunpack.c.l.b16 %v110
    %v152 = vunpack.c.l.b16 %v111
    %v153 = vunpack.c.l.b16 %v112
    %v154 = vunpack.c.l.b16 %v113
    %v155 = vunpack.c.l.b16 %v114
    %v156 = vunpack.c.l.b16 %v115
    %v157 = vunpack.c.l.b16 %v116
    %v158 = vpack.c.b16 %v143, %v142
    %v159 = vpack.c.b16 %v145, %v144
    %v160 = vpack.c.b16 %v147, %v146
    %v161 = vpack.c.b16 %v149, %v148
    %v162 = vpack.c.b16 %v151, %v150
    %v163 = vpack.c.b16 %v153, %v152
    %v164 = vpack.c.b16 %v155, %v154
    %v165 = vpack.c.b16 %v157, %v156
    %174 = vmatprep.subr.bf16.mxu0 0
    %175 = vmatpush1.bf16.msra.mxu0 %v165
    %176 = vmatprep.subr.bf16.mxu0 0
    %177 = vmatpush1.bf16.msra.mxu0 %v164
    %178 = vmatprep.subr.bf16.mxu0 0
    %179 = vmatpush1.bf16.msra.mxu0 %v163
    %180 = vmatprep.subr.bf16.mxu0 0
    %181 = vmatpush1.bf16.msra.mxu0 %v162
    %182 = vmatprep.subr.bf16.mxu0 0
    %183 = vmatpush1.bf16.msra.mxu0 %v161
    %184 = vmatprep.subr.bf16.mxu0 0
    %185 = vmatpush1.bf16.msra.mxu0 %v160
    %186 = vmatprep.subr.bf16.mxu0 0
    %187 = vmatpush1.bf16.msra.mxu0 %v159
    %188 = vmatprep.subr.bf16.mxu0 0
    %189 = vmatpush1.bf16.msra.mxu0 %v158
    %190 = vmatprep.subr.bf16.mxu0 0
    %191 = vmatpush2.bf16.msra.mxu0 0
    %192 = vmatprep.subr.bf16.mxu0 0
    %193 = vmatpush2.bf16.msra.mxu0 0
    %194 = vmatprep.subr.bf16.mxu0 0
    %195 = vmatpush2.bf16.msra.mxu0 0
    %196 = vmatprep.subr.bf16.mxu0 0
    %197 = vmatpush2.bf16.msra.mxu0 0
    %198 = vmatprep.subr.bf16.mxu0 0
    %199 = vmatpush2.bf16.msra.mxu0 0
    %200 = vmatprep.subr.bf16.mxu0 0
    %201 = vmatpush2.bf16.msra.mxu0 0
    %202 = vmatprep.subr.bf16.mxu0 0
    %203 = vmatpush2.bf16.msra.mxu0 0
    %204 = vmatprep.subr.bf16.mxu0 0
    %205 = vmatpush2.bf16.msra.mxu0 0
    %206 = vmatprep.mubr.bf16.mxu0 0
    %207 = vmatmul.mubr.bf16.gmra.mxu0 %v119
    %v208 = vpop.f32.mrf.mxu0
    %v209 = vadd.f32 %v124, %v208
    %v210 = vpop.f32.mrf.mxu0
    %v211 = vpop.f32.mrf.mxu0
    %v212 = vadd.f32 %v124, %v211
    %v213 = vpop.f32.mrf.mxu0
    %214 = vdwg.mxu0
    %v215 = vtanh.pop %v209
    %v216 = vtanh.pop %v212
    %s217 = scalar_lea.vmem [#allocation2], 128
    %v218 = vld [vmem:[%s217] sm:$0xf]
    %v219 = vld [vmem:[%s217 + $0x4] sm:$0xf]
    %v220 = vld [vmem:[%s217 + $0x8] sm:$0xf]
    %v221 = vld [vmem:[%s217 + $0xc] sm:$0xf]
    %v222 = vld [vmem:[%s217 + $0x10] sm:$0xf]
    %v223 = vld [vmem:[%s217 + $0x14] sm:$0xf]
    %v224 = vld [vmem:[%s217 + $0x18] sm:$0xf]
    %v225 = vld [vmem:[%s217 + $0x1c] sm:$0xf]
    %v226 = vld [vmem:[%s217 + $0x20] sm:$0xf]
    %v227 = vld [vmem:[%s217 + $0x24] sm:$0xf]
    %v228 = vld [vmem:[%s217 + $0x28] sm:$0xf]
    %v229 = vld [vmem:[%s217 + $0x2c] sm:$0xf]
    %v230 = vld [vmem:[%s217 + $0x30] sm:$0xf]
    %v231 = vld [vmem:[%s217 + $0x34] sm:$0xf]
    %v232 = vld [vmem:[%s217 + $0x38] sm:$0xf]
    %v233 = vld [vmem:[%s217 + $0x3c] sm:$0xf]
    %s234 = scalar_lea.vmem %s2, 2
    %v235 = vld [vmem:[%s234] sm:$0x1]
    %v236 = vpack.c.bf16 %v216, %v215
    %v238 = vlaneseq
    %v239 = vshrl.u32 %v238, 7
    %v240 = vsub.s32 0, %v239
    %v241 = vrot.slane %v235, %v240
    %v259 = vunpack.c.l.b16 %v218
    %v260 = vunpack.c.l.b16 %v219
    %v261 = vunpack.c.l.b16 %v220
    %v262 = vunpack.c.l.b16 %v221
    %v263 = vunpack.c.l.b16 %v222
    %v264 = vunpack.c.l.b16 %v223
    %v265 = vunpack.c.l.b16 %v224
    %v266 = vunpack.c.l.b16 %v225
    %v267 = vunpack.c.l.b16 %v226
    %v268 = vunpack.c.l.b16 %v227
    %v269 = vunpack.c.l.b16 %v228
    %v270 = vunpack.c.l.b16 %v229
    %v271 = vunpack.c.l.b16 %v230
    %v272 = vunpack.c.l.b16 %v231
    %v273 = vunpack.c.l.b16 %v232
    %v274 = vunpack.c.l.b16 %v233
    %v275 = vpack.c.b16 %v260, %v259
    %v276 = vpack.c.b16 %v262, %v261
    %v277 = vpack.c.b16 %v264, %v263
    %v278 = vpack.c.b16 %v266, %v265
    %v279 = vpack.c.b16 %v268, %v267
    %v280 = vpack.c.b16 %v270, %v269
    %v281 = vpack.c.b16 %v272, %v271
    %v282 = vpack.c.b16 %v274, %v273
    %291 = vmatprep.subr.bf16.mxu0 0
    %292 = vmatpush1.bf16.msra.mxu0 %v282
    %293 = vmatprep.subr.bf16.mxu0 0
    %294 = vmatpush1.bf16.msra.mxu0 %v281
    %295 = vmatprep.subr.bf16.mxu0 0
    %296 = vmatpush1.bf16.msra.mxu0 %v280
    %297 = vmatprep.subr.bf16.mxu0 0
    %298 = vmatpush1.bf16.msra.mxu0 %v279
    %299 = vmatprep.subr.bf16.mxu0 0
    %300 = vmatpush1.bf16.msra.mxu0 %v278
    %301 = vmatprep.subr.bf16.mxu0 0
    %302 = vmatpush1.bf16.msra.mxu0 %v277
    %303 = vmatprep.subr.bf16.mxu0 0
    %304 = vmatpush1.bf16.msra.mxu0 %v276
    %305 = vmatprep.subr.bf16.mxu0 0
    %306 = vmatpush1.bf16.msra.mxu0 %v275
    %307 = vmatprep.subr.bf16.mxu0 0
    %308 = vmatpush2.bf16.msra.mxu0 0
    %309 = vmatprep.subr.bf16.mxu0 0
    %310 = vmatpush2.bf16.msra.mxu0 0
    %311 = vmatprep.subr.bf16.mxu0 0
    %312 = vmatpush2.bf16.msra.mxu0 0
    %313 = vmatprep.subr.bf16.mxu0 0
    %314 = vmatpush2.bf16.msra.mxu0 0
    %315 = vmatprep.subr.bf16.mxu0 0
    %316 = vmatpush2.bf16.msra.mxu0 0
    %317 = vmatprep.subr.bf16.mxu0 0
    %318 = vmatpush2.bf16.msra.mxu0 0
    %319 = vmatprep.subr.bf16.mxu0 0
    %320 = vmatpush2.bf16.msra.mxu0 0
    %321 = vmatprep.subr.bf16.mxu0 0
    %322 = vmatpush2.bf16.msra.mxu0 0
    %323 = vmatprep.mubr.bf16.mxu0 0
    %324 = vmatmul.mubr.bf16.gmra.mxu0 %v236
    %v325 = vpop.f32.mrf.mxu0
    %v326 = vadd.f32 %v241, %v325
    %v327 = vpop.f32.mrf.mxu0
    %v328 = vpop.f32.mrf.mxu0
    %v329 = vadd.f32 %v241, %v328
    %v330 = vpop.f32.mrf.mxu0
    %331 = vdwg.mxu0
    %v332 = vtanh.pop %v326
    %v333 = vtanh.pop %v329
    %s334 = scalar_lea.vmem [#allocation2], 192
    %v335 = vld [vmem:[%s334] sm:$0xf]
    %v336 = vld [vmem:[%s334 + $0x4] sm:$0xf]
    %v337 = vld [vmem:[%s334 + $0x8] sm:$0xf]
    %v338 = vld [vmem:[%s334 + $0xc] sm:$0xf]
    %v339 = vld [vmem:[%s334 + $0x10] sm:$0xf]
    %v340 = vld [vmem:[%s334 + $0x14] sm:$0xf]
    %v341 = vld [vmem:[%s334 + $0x18] sm:$0xf]
    %v342 = vld [vmem:[%s334 + $0x1c] sm:$0xf]
    %v343 = vld [vmem:[%s334 + $0x20] sm:$0xf]
    %v344 = vld [vmem:[%s334 + $0x24] sm:$0xf]
    %v345 = vld [vmem:[%s334 + $0x28] sm:$0xf]
    %v346 = vld [vmem:[%s334 + $0x2c] sm:$0xf]
    %v347 = vld [vmem:[%s334 + $0x30] sm:$0xf]
    %v348 = vld [vmem:[%s334 + $0x34] sm:$0xf]
    %v349 = vld [vmem:[%s334 + $0x38] sm:$0xf]
    %v350 = vld [vmem:[%s334 + $0x3c] sm:$0xf]
    %s351 = scalar_lea.vmem %s2, 3
    %v352 = vld [vmem:[%s351] sm:$0x1]
    %v353 = vpack.c.bf16 %v333, %v332
    %v355 = vlaneseq
    %v356 = vshrl.u32 %v355, 7
    %v357 = vsub.s32 0, %v356
    %v358 = vrot.slane %v352, %v357
    %v376 = vunpack.c.l.b16 %v335
    %v377 = vunpack.c.l.b16 %v336
    %v378 = vunpack.c.l.b16 %v337
    %v379 = vunpack.c.l.b16 %v338
    %v380 = vunpack.c.l.b16 %v339
    %v381 = vunpack.c.l.b16 %v340
    %v382 = vunpack.c.l.b16 %v341
    %v383 = vunpack.c.l.b16 %v342
    %v384 = vunpack.c.l.b16 %v343
    %v385 = vunpack.c.l.b16 %v344
    %v386 = vunpack.c.l.b16 %v345
    %v387 = vunpack.c.l.b16 %v346
    %v388 = vunpack.c.l.b16 %v347
    %v389 = vunpack.c.l.b16 %v348
    %v390 = vunpack.c.l.b16 %v349
    %v391 = vunpack.c.l.b16 %v350
    %v392 = vpack.c.b16 %v377, %v376
    %v393 = vpack.c.b16 %v379, %v378
    %v394 = vpack.c.b16 %v381, %v380
    %v395 = vpack.c.b16 %v383, %v382
    %v396 = vpack.c.b16 %v385, %v384
    %v397 = vpack.c.b16 %v387, %v386
    %v398 = vpack.c.b16 %v389, %v388
    %v399 = vpack.c.b16 %v391, %v390
    %408 = vmatprep.subr.bf16.mxu0 0
    %409 = vmatpush1.bf16.msra.mxu0 %v399
    %410 = vmatprep.subr.bf16.mxu0 0
    %411 = vmatpush1.bf16.msra.mxu0 %v398
    %412 = vmatprep.subr.bf16.mxu0 0
    %413 = vmatpush1.bf16.msra.mxu0 %v397
    %414 = vmatprep.subr.bf16.mxu0 0
    %415 = vmatpush1.bf16.msra.mxu0 %v396
    %416 = vmatprep.subr.bf16.mxu0 0
    %417 = vmatpush1.bf16.msra.mxu0 %v395
    %418 = vmatprep.subr.bf16.mxu0 0
    %419 = vmatpush1.bf16.msra.mxu0 %v394
    %420 = vmatprep.subr.bf16.mxu0 0
    %421 = vmatpush1.bf16.msra.mxu0 %v393
    %422 = vmatprep.subr.bf16.mxu0 0
    %423 = vmatpush1.bf16.msra.mxu0 %v392
    %424 = vmatprep.subr.bf16.mxu0 0
    %425 = vmatpush2.bf16.msra.mxu0 0
    %426 = vmatprep.subr.bf16.mxu0 0
    %427 = vmatpush2.bf16.msra.mxu0 0
    %428 = vmatprep.subr.bf16.mxu0 0
    %429 = vmatpush2.bf16.msra.mxu0 0
    %430 = vmatprep.subr.bf16.mxu0 0
    %431 = vmatpush2.bf16.msra.mxu0 0
    %432 = vmatprep.subr.bf16.mxu0 0
    %433 = vmatpush2.bf16.msra.mxu0 0
    %434 = vmatprep.subr.bf16.mxu0 0
    %435 = vmatpush2.bf16.msra.mxu0 0
    %436 = vmatprep.subr.bf16.mxu0 0
    %437 = vmatpush2.bf16.msra.mxu0 0
    %438 = vmatprep.subr.bf16.mxu0 0
    %439 = vmatpush2.bf16.msra.mxu0 0
    %440 = vmatprep.mubr.bf16.mxu0 0
    %441 = vmatmul.mubr.bf16.gmra.mxu0 %v353
    %v442 = vpop.f32.mrf.mxu0
    %v443 = vadd.f32 %v358, %v442
    %v444 = vpop.f32.mrf.mxu0
    %v445 = vpop.f32.mrf.mxu0
    %v446 = vadd.f32 %v358, %v445
    %v447 = vpop.f32.mrf.mxu0
    %448 = vdwg.mxu0
    %449 = vst [vmem:[%s3] sm:$0xff] %v443
    %450 = vst [vmem:[%s3 + $0x8] sm:$0xff] %v446
    // Predicated region
    $region18: #{model_deploy_forward.1} parent=1 // pred_check
      _
    $region19: #{model_deploy_forward.1} parent=1 // pred_check_branch
      %452 = sbr.rel (0) target = $region21
    $region20: #{model_deploy_forward.1} parent=1 // pred_region
      _
    $region21: #{model_deploy_forward.1} parent=1 // pred_fallthru
      _
    // Predicated region
    $region22: #{model_deploy_forward.1} parent=1 // pred_check
      _
    $region23: #{model_deploy_forward.1} parent=1 // pred_check_branch
      %454 = sbr.rel (0) target = $region25
    $region24: #{model_deploy_forward.1} parent=1 // pred_region
      _
    $region25: #{model_deploy_forward.1} parent=1 // pred_fallthru
      _
    %455 = vsyncpa [#allocation3], 1

</llo_original>
